<compile_context>
chip_gen: v6e
topology: v6e:2x2x1
jax: 0.10.0
libtpu: 0.0.40
codegen_flags: <defaults>
</compile_context>

<pallas_src>
import math

import jax
import jax.numpy as jnp
from jax.experimental import pallas as pl
from jax.experimental.pallas import tpu as pltpu


def _dropblock_mul_kernel(x_ref, bm_ref, scale_ref, o_ref):
    """out = x * bm (broadcast over channels) * scale (f32 SMEM scalar)."""
    s = scale_ref[0, 0]                               # f32, full precision
    prod = x_ref[...] * bm_ref[...]                   # (TB,TC,TL) * (TB,1,TL)
    o_ref[...] = (prod * s).astype(o_ref.dtype)


def _tpu_budgets():
    """(x-tile byte budget, vmem_limit_bytes), gated on VMEM capacity."""
    cap = 64 << 20                                    # conservative default (v7x per-TC)
    try:
        cap = int(getattr(pltpu.get_tpu_info(), "vmem_capacity_bytes", cap))
    except Exception:
        pass
    if cap >= (128 << 20):                            # v5e / v6e: 128 MiB VMEM
        return 8 << 20, 64 << 20
    return 4 << 20, 48 << 20                          # v7x: 64 MiB per TensorCore


def dropblock(x, key, *, p: float, bs: int = 1, donate_x: bool = False):
    """Pallas DropBlock forward.  x: (B, C, L) float array (NCL layout)."""
    B, C, L = x.shape
    gamma = p / (bs ** 2)

    # ---- Mask prep (O(B*L), plain JAX; hoisted out of the kernel) ---------
    u = jax.random.uniform(key, (B, L), dtype=jnp.float32)
    mask = (u < gamma).astype(jnp.float32)
    pad = bs // 2
    mp = jnp.pad(mask, ((0, 0), (pad, pad)))
    # 1-D max pool, kernel=bs, stride=1; zero padding == -inf padding for a
    # {0,1} mask.  Windows i..i+bs-1 for i in [0, L) reproduce PyTorch's
    # trailing-element trim for even bs exactly.
    pooled = mp[:, 0:L]
    for k in range(1, bs):
        pooled = jnp.maximum(pooled, mp[:, k:k + L])
    bm = 1.0 - pooled                                  # (B, L), values in {0, 1}
    # GLOBAL normalization, kept in f32 (passed as SMEM scalar, not folded).
    scale = (bm.size / jnp.sum(bm)).astype(jnp.float32).reshape(1, 1)

    # ---- Lane-dense layout: merge g channels so the lane dim hits 128k ----
    g = 1
    if L % 128 != 0:
        g0 = 128 // math.gcd(L, 128)
        if g0 > 1 and C % g0 == 0:
            g = g0
    C2, L2 = C // g, L * g
    x_r = x.reshape(B, C2, L2)
    bm_r = (jnp.tile(bm, (1, g)) if g > 1 else bm).astype(x.dtype).reshape(B, 1, L2)

    # ---- Tile selection (cdiv-safe; generation-gated budget) --------------
    itemsize = jnp.dtype(x.dtype).itemsize
    tile_bytes, vmem_limit = _tpu_budgets()
    budget = max(1024, tile_bytes // itemsize)         # elements per x tile
    align_c = max(8, (8 * 4) // itemsize)              # sublane packing: 8/16/32

    max_tl = max(128, budget // align_c)
    TL = L2 if L2 <= max_tl else max(128, (max_tl // 128) * 128)
    max_tc = max(1, budget // TL)
    TC = C2 if C2 <= max_tc else max(align_c, (max_tc // align_c) * align_c)
    TB = min(B, max(1, budget // (TC * TL)))

    # Megacore: make sure there are >= 2 grid steps when the tensor allows it
    # (otherwise one of v7x's two TensorCores sits idle).
    if pl.cdiv(B, TB) * pl.cdiv(C2, TC) * pl.cdiv(L2, TL) == 1:
        if B >= 2:
            TB = (B + 1) // 2
        elif C2 >= 2 * align_c:
            TC = align_c * max(1, C2 // (2 * align_c))
        elif L2 >= 256:
            TL = 128 * max(1, L2 // 256)

    grid = (pl.cdiv(B, TB), pl.cdiv(C2, TC), pl.cdiv(L2, TL))
    bytes_accessed = 2 * x.size * itemsize + bm_r.size * itemsize + 4

    out = pl.pallas_call(
        _dropblock_mul_kernel,
        out_shape=jax.ShapeDtypeStruct((B, C2, L2), x.dtype),
        grid=grid,
        in_specs=[
            pl.BlockSpec((TB, TC, TL), lambda i, j, l: (i, j, l)),
            pl.BlockSpec((TB, 1, TL), lambda i, j, l: (i, 0, l)),
            pl.BlockSpec(memory_space=pltpu.MemorySpace.SMEM),   # (1,1) f32 scale
        ],
        out_specs=pl.BlockSpec((TB, TC, TL), lambda i, j, l: (i, j, l)),
        compiler_params=pltpu.CompilerParams(
            dimension_semantics=("parallel", "parallel", "parallel"),
            vmem_limit_bytes=vmem_limit,
        ),
        cost_estimate=pl.CostEstimate(
            flops=2 * B * C * L,
            transcendentals=0,
            bytes_accessed=bytes_accessed,
        ),
        input_output_aliases=({0: 0} if donate_x else {}),
    )(x_r, bm_r, scale)

    return out.reshape(B, C, L)


def _reference(x, key, *, p: float, bs: int):
    """Pure-JAX reference mirroring the PyTorch module (same RNG as kernel)."""
    B, C, L = x.shape
    gamma = p / (bs ** 2)
    u = jax.random.uniform(key, (B, L), dtype=jnp.float32)
    mask = (u < gamma).astype(jnp.float32)
    pad = bs // 2
    mp = jnp.pad(mask, ((0, 0), (pad, pad)))
    pooled = mp[:, 0:L]
    for k in range(1, bs):
        pooled = jnp.maximum(pooled, mp[:, k:k + L])
    bm = 1.0 - pooled
    return x * bm[:, None, :] * bm.size / jnp.sum(bm)


if __name__ == "__main__":
    # Deterministic parameters (module __init__): p, bs.
    p, bs = 0.3, 3
    key = jax.random.PRNGKey(0)

    # Case 1: tiny NCL tensor (no channel-merge; exercises the megacore split).
    B, C, L = 2, 4, 16
    kx, kmask, key = jax.random.split(key, 3)
    x = jax.random.normal(kx, (B, C, L), dtype=jnp.float32)
    out = jax.block_until_ready(dropblock(x, kmask, p=p, bs=bs))
    ref = _reference(x, kmask, p=p, bs=bs)
    assert out.shape == (B, C, L)
    assert jnp.allclose(out, ref, atol=1e-5, rtol=1e-5)

    # Case 2: L not a multiple of 128 -> lane-dense channel-merge path (g=4).
    B2, C2, L2 = 4, 8, 96
    kx2, kmask2 = jax.random.split(key)
    x2 = jax.random.normal(kx2, (B2, C2, L2), dtype=jnp.float32)
    out2 = jax.block_until_ready(dropblock(x2, kmask2, p=p, bs=bs))
    ref2 = _reference(x2, kmask2, p=p, bs=bs)
    assert out2.shape == (B2, C2, L2)
    assert jnp.allclose(out2, ref2, atol=1e-5, rtol=1e-5)

    print("KERNEL_OK")
</pallas_src>

<mosaic_0001>
module attributes {stable_mosaic.version = 11 : i64} {
  func.func @_dropblock_mul_kernel(%arg0: i32, %arg1: i32, %arg2: i32, %arg3: memref<1x4x16xf32, #tpu.memory_space<vmem>>, %arg4: memref<1x1x16xf32, #tpu.memory_space<vmem>>, %arg5: memref<1x1xf32, #tpu.memory_space<smem>>, %arg6: memref<1x4x16xf32, #tpu.memory_space<vmem>>) attributes {dimension_semantics = [#tpu.dimension_semantics<parallel>, #tpu.dimension_semantics<parallel>, #tpu.dimension_semantics<parallel>], iteration_bounds = array<i64: 2, 1, 1>, scalar_prefetch = 0 : i64, scratch_operands = 0 : i64, tpu.core_type = #tpu.core_type<tc>, window_params = [{transform_indices = @transform_0, window_bounds = array<i64: 1, 4, 16>}, {transform_indices = @transform_1, window_bounds = array<i64: 1, 1, 16>}, {transform_indices = @transform_2, window_bounds = array<i64: 1, 1>}, {transform_indices = @transform_3, window_bounds = array<i64: 1, 4, 16>}]} {
    %c0 = arith.constant 0 : index
    %c0_0 = arith.constant 0 : index
    %0 = memref.load %arg5[%c0, %c0_0] : memref<1x1xf32, #tpu.memory_space<smem>>
    %c0_1 = arith.constant 0 : index
    %c0_2 = arith.constant 0 : index
    %c0_3 = arith.constant 0 : index
    %1 = vector.load %arg3[%c0_1, %c0_2, %c0_3] : memref<1x4x16xf32, #tpu.memory_space<vmem>>, vector<1x4x16xf32>
    %c0_4 = arith.constant 0 : index
    %c0_5 = arith.constant 0 : index
    %c0_6 = arith.constant 0 : index
    %2 = vector.load %arg4[%c0_4, %c0_5, %c0_6] : memref<1x1x16xf32, #tpu.memory_space<vmem>>, vector<1x1x16xf32>
    %3 = vector.broadcast %2 : vector<1x1x16xf32> to vector<1x4x16xf32>
    %4 = arith.mulf %1, %3 : vector<1x4x16xf32>
    %5 = vector.broadcast %0 : f32 to vector<1x4x16xf32>
    %6 = arith.mulf %4, %5 : vector<1x4x16xf32>
    %c0_7 = arith.constant 0 : index
    %c0_8 = arith.constant 0 : index
    %c0_9 = arith.constant 0 : index
    %7 = vector.load %arg6[%c0_7, %c0_8, %c0_9] : memref<1x4x16xf32, #tpu.memory_space<vmem>>, vector<1x4x16xf32>
    tpu.vector_store %arg6[%c0_7, %c0_8, %c0_9], %6 {strides = array<i32>} : memref<1x4x16xf32, #tpu.memory_space<vmem>>, vector<1x4x16xf32>,
    return
  }
  func.func @transform_0(%arg0: i32, %arg1: i32, %arg2: i32) -> (i32, i32, i32) {
    %c0_i32 = arith.constant 0 : i32
    return %arg0, %arg1, %arg2 : i32, i32, i32
  }
  func.func @transform_1(%arg0: i32, %arg1: i32, %arg2: i32) -> (i32, i32, i32) {
    %c0_i32 = arith.constant 0 : i32
    %c0_i32_0 = arith.constant 0 : i32
    return %arg0, %c0_i32, %arg2 : i32, i32, i32
  }
  func.func @transform_2(%arg0: i32, %arg1: i32, %arg2: i32) -> (i32, i32) {
    %c0_i32 = arith.constant 0 : i32
    %c0_i32_0 = arith.constant 0 : i32
    %c0_i32_1 = arith.constant 0 : i32
    return %c0_i32, %c0_i32_0 : i32, i32
  }
  func.func @transform_3(%arg0: i32, %arg1: i32, %arg2: i32) -> (i32, i32, i32) {
    %c0_i32 = arith.constant 0 : i32
    return %arg0, %arg1, %arg2 : i32, i32, i32
  }
}

</mosaic_0001>

<llo_original>
// kernel: tpu_custom_call.1
$region0: #{tpu_custom_call.1}
  #allocation0 [shape = 'u32[]', space=smem, size = 0x4, offset = 0x4, fixed_abs, tag = 'smem constant byte address 0x4 - core index']
  #allocation1 [shape = 'u32[144,128]{1,0:T(1,128)}', space=vmem, size = 0x12000, scoped, tag = 'internal scratch']
  #allocation2 [shape = 'f32[1,1]{1,0:T(1,128)S(6)}', space=smem, size = 0x200, scoped, tag = 'scoped memory for tpu_custom_call.1']
  %s0 = inlined_call_operand.hbm [shape: f32[2,4,16], index: 0, kind: input, shape index: {}]
  %s1 = inlined_call_operand.vmem [shape: f32[2,1,16], index: 1, kind: input, shape index: {}]
  %s2 = inlined_call_operand.<no memory space> [shape: f32[1,1], index: 2, kind: input, shape index: {}]
  %s3 = inlined_call_operand.hbm [shape: f32[2,4,16], index: 3, kind: output, shape index: {}]
  %s4 = sld [smem:[#allocation0]]
  $region49: #{tpu_custom_call.1} parent=0
    _
  %s6 = ssub.s32 1, %s4
  %s7 = scalar_select 0, %s6, %s4
  %8 = sst [smem:[#allocation2]] %s2
  $region1: #{tpu_custom_call.1} parent=0
    #allocation3 [shape = 'u8[4096]{0}', space=vmem, size = 0x1000, scoped, tag = 'input window, operand 0']
    #allocation4 [shape = 's32[2]{0}', space=sflag, size = 0x8, scoped, tag = 'scoped memory for tpu_custom_call.1']
    #allocation5 [shape = 's32[2]{0}', space=sflag, size = 0x8, scoped, tag = 'scoped memory for tpu_custom_call.1']
    #allocation6 [shape = 'u8[4096]{0}', space=vmem, size = 0x1000, scoped, tag = 'output window, operand 0']
    %9 = vsyncpa [#allocation4], 0
    %s10 = scalar_lea.sflag [#allocation4], 1
    %11 = vsyncpa %s10, 0
    %12 = vsyncpa [#allocation5], 0
    %s13 = scalar_lea.sflag [#allocation5], 1
    %14 = vsyncpa %s13, 0
    loop: start=0, step=1, limit=4
    $region2: #{tpu_custom_call.1} parent=1 // loop_pre_header
      _
    $region3: #{tpu_custom_call.1} parent=1 // loop_header
      %s16 = sphi 0, %s20
      %p17 = scmp.ge.s32.totalorder %s16, 4
      %s23 = sphi 0, %s42
      %s24 = sphi 0, %s38
      %s25 = sphi 0, %s34
      %s26 = sphi 0, %s23
      %s27 = sphi 0, %s24
      %s28 = sphi 0, %s25
      %s29 = sphi 0, %s26
      %s30 = sphi 0, %s27
      %s31 = sphi 0, %s28
      %s49 = sphi 0, %s51
      %s52 = sphi 0, %s49
      %s53 = sphi 0, %s52
      %s69 = sphi 0, %s53
      %s77 = sphi 0, %s79
      %s80 = sphi 0, %s77
      %s81 = sphi 0, %s80
      %s97 = sphi 0, %s81
      %s101 = sphi 0, %s101
      %s103 = sphi 0, %s101
      %s104 = sphi 0, %s103
      %s118 = sphi 0, %s104
      %s128 = sphi 0, %s130
      %s131 = sphi 0, %s128
      %s132 = sphi 0, %s131
      %s148 = sphi 0, %s132
    $region4: #{tpu_custom_call.1} parent=1 // loop_header_branch
      %19 = sbr.rel (%p17) target = $region8
    $region5: #{tpu_custom_call.1} parent=1 // loop_body
      %s21 = ssub.s32 %s16, 1
      %s22 = ssub.s32 %s16, 2
      %s32 = sadd.s32 1, %s25
      %p33 = scmp.ge.s32.totalorder %s32, 1
      %s34 = scalar_select %p33, 0, %s32
      %s35 = sadd.s32 1, %s24
      %s36 = scalar_select %p33, %s35, %s24
      %p37 = scmp.ge.s32.totalorder %s36, 1
      %s38 = scalar_select %p37, 0, %s36
      %s39 = sadd.s32 1, %s23
      %s40 = scalar_select %p37, %s39, %s23
      %p41 = scmp.ge.s32.totalorder %s40, 2
      %s42 = scalar_select %p41, 0, %s40
      %s43 = ssub.s32 %s23, %s42
      %s44 = ssub.s32 %s24, %s38
      %s45 = sor.u32 %s43, %s44
      %s46 = ssub.s32 %s25, %s34
      %s47 = sor.u32 %s45, %s46
      %p48 = scmp.eq.s32.totalorder %s47, 0
      %s50 = sadd.s32 %s49, 1
      %s51 = scalar_select %p48, %s49, %s50
      %p54 = pneg %p48
      %p55 = scmp.eq.s32.totalorder %s16, 1
      %p56 = por %p54, %p55
      %p57 = scmp.ne.s32.totalorder %s49, %s52
      %p58 = scmp.eq.s32.totalorder %s16, 0
      %p59 = por %p57, %p58
      %p60 = scmp.ne.s32.totalorder %s49, %s52
      %p61 = scmp.eq.s32.totalorder %s21, 1
      %p62 = por %p60, %p61
      %p63 = scmp.ne.s32.totalorder %s52, %s53
      %p64 = scmp.eq.s32.totalorder %s21, 0
      %p65 = por %p63, %p64
      %p66 = scmp.ne.s32.totalorder %s52, %s53
      %p67 = scmp.eq.s32.totalorder %s22, 1
      %p68 = por %p66, %p67
      %p70 = scmp.ne.s32.totalorder %s53, %s69
      %p71 = scmp.eq.s32.totalorder %s22, 0
      %p72 = por %p70, %p71
      %s73 = ssub.s32 %s23, %s42
      %s74 = ssub.s32 %s25, %s34
      %s75 = sor.u32 %s73, %s74
      %p76 = scmp.eq.s32.totalorder %s75, 0
      %s78 = sadd.s32 %s77, 1
      %s79 = scalar_select %p76, %s77, %s78
      %p82 = pneg %p76
      %p83 = scmp.eq.s32.totalorder %s16, 1
      %p84 = por %p82, %p83
      %p85 = scmp.ne.s32.totalorder %s77, %s80
      %p86 = scmp.eq.s32.totalorder %s16, 0
      %p87 = por %p85, %p86
      %p88 = scmp.ne.s32.totalorder %s77, %s80
      %p89 = scmp.eq.s32.totalorder %s21, 1
      %p90 = por %p88, %p89
      %p91 = scmp.ne.s32.totalorder %s80, %s81
      %p92 = scmp.eq.s32.totalorder %s21, 0
      %p93 = por %p91, %p92
      %p94 = scmp.ne.s32.totalorder %s80, %s81
      %p95 = scmp.eq.s32.totalorder %s22, 1
      %p96 = por %p94, %p95
      %p98 = scmp.ne.s32.totalorder %s81, %s97
      %p99 = scmp.eq.s32.totalorder %s22, 0
      %p100 = por %p98, %p99
      %s102 = sadd.s32 %s101, 1
      %p105 = scmp.eq.s32.totalorder %s16, 1
      %p106 = scmp.ne.s32.totalorder %s101, %s103
      %p107 = scmp.eq.s32.totalorder %s16, 0
      %p108 = por %p106, %p107
      %p109 = scmp.ne.s32.totalorder %s101, %s103
      %p110 = scmp.eq.s32.totalorder %s21, 1
      %p111 = por %p109, %p110
      %p112 = scmp.ne.s32.totalorder %s103, %s104
      %p113 = scmp.eq.s32.totalorder %s21, 0
      %p114 = por %p112, %p113
      %p115 = scmp.ne.s32.totalorder %s103, %s104
      %p116 = scmp.eq.s32.totalorder %s22, 1
      %p117 = por %p115, %p116
      %p119 = scmp.ne.s32.totalorder %s104, %s118
      %p120 = scmp.eq.s32.totalorder %s22, 0
      %p121 = por %p119, %p120
      %s122 = ssub.s32 %s23, %s42
      %s123 = ssub.s32 %s24, %s38
      %s124 = sor.u32 %s122, %s123
      %s125 = ssub.s32 %s25, %s34
      %s126 = sor.u32 %s124, %s125
      %p127 = scmp.eq.s32.totalorder %s126, 0
      %s129 = sadd.s32 %s128, 1
      %s130 = scalar_select %p127, %s128, %s129
      %p133 = pneg %p127
      %p134 = scmp.eq.s32.totalorder %s16, 1
      %p135 = por %p133, %p134
      %p136 = scmp.ne.s32.totalorder %s128, %s131
      %p137 = scmp.eq.s32.totalorder %s16, 0
      %p138 = por %p136, %p137
      %p139 = scmp.ne.s32.totalorder %s128, %s131
      %p140 = scmp.eq.s32.totalorder %s21, 1
      %p141 = por %p139, %p140
      %p142 = scmp.ne.s32.totalorder %s131, %s132
      %p143 = scmp.eq.s32.totalorder %s21, 0
      %p144 = por %p142, %p143
      %p145 = scmp.ne.s32.totalorder %s131, %s132
      %p146 = scmp.eq.s32.totalorder %s22, 1
      %p147 = por %p145, %p146
      %p149 = scmp.ne.s32.totalorder %s132, %s148
      %p150 = scmp.eq.s32.totalorder %s22, 0
      %p151 = por %p149, %p150
      %p152 = scmp.le.s32.totalorder 1, %s16
      %p153 = scmp.lt.s32.totalorder %s16, 3
      %p154 = pnand %p152, %p153
      %p155 = pneg %p154
      // Predicated region
      $region9: #{tpu_custom_call.1} parent=5 // pred_check
        _
      $region10: #{tpu_custom_call.1} parent=5 // pred_check_branch
        %157 = sbr.rel (%p154) target = $region12
      $region11: #{tpu_custom_call.1} parent=5 // pred_region
        %s158 = ssub.s32 %s16, 1
        // Predicated region
        $region13: #{tpu_custom_call.1} parent=11 // pred_check
          %p159 = pneg %p114
        $region14: #{tpu_custom_call.1} parent=11 // pred_check_branch
          %161 = sbr.rel (%p159) target = $region16
        $region15: #{tpu_custom_call.1} parent=11 // pred_region
          _
        $region16: #{tpu_custom_call.1} parent=11 // pred_fallthru
          _
      $region12: #{tpu_custom_call.1} parent=5 // pred_fallthru
        _
      %p162 = scmp.lt.s32.totalorder %s16, 2
      // Predicated region
      $region17: #{tpu_custom_call.1} parent=5 // pred_check
        %p163 = pneg %p162
      $region18: #{tpu_custom_call.1} parent=5 // pred_check_branch
        %165 = sbr.rel (%p163) target = $region20
      $region19: #{tpu_custom_call.1} parent=5 // pred_region
        // Predicated region
        $region21: #{tpu_custom_call.1} parent=19 // pred_check
          %p166 = pneg %p59
        $region22: #{tpu_custom_call.1} parent=19 // pred_check_branch
          %168 = sbr.rel (%p166) target = $region24
        $region23: #{tpu_custom_call.1} parent=19 // pred_region
          %s169 = sand.u32 %s49, 1
          %s170 = scalar_lea.sflag [#allocation4], %s169
          %s171 = sand.u32 %s49, 1
          %s172 = smul.addr %s171, 4
          %s173 = scalar_lea.vmem [#allocation3], %s172
          %s175 = ssub.s32 64, 64
          %176 = vsyncadd %s170, %s175
          %s177 = sadd.s32 %s25, %s24
          %s178 = sadd.s32 %s177, %s23
          %s179 = smul.addr %s178, 64
          %s180 = scalar_lea.hbm %s0, %s179
          %s182 = sshll.u32 %s173, 4
          %s183 = int_to_ptr.vmem [resolvable:$true] %s182
          %185 = dma.hbm_to_vmem [thread:$0]  %s180, 64, %s183, %s170
        $region24: #{tpu_custom_call.1} parent=19 // pred_fallthru
          _
        // Predicated region
        $region25: #{tpu_custom_call.1} parent=19 // pred_check
          %p186 = pneg %p87
        $region26: #{tpu_custom_call.1} parent=19 // pred_check_branch
          %188 = sbr.rel (%p186) target = $region28
        $region27: #{tpu_custom_call.1} parent=19 // pred_region
          %p189 = scmp.lt.s32.totalorder %s23, 1
          %s190 = scalar_select %p189, %s23, 1
          %p191 = scmp.lt.s32.totalorder %s25, 0
          %s192 = scalar_select %p191, %s25, 0
          %s193 = sadd.s32 %s192, %s190
          %s194 = scalar_lea.vmem %s1, %s193
        $region28: #{tpu_custom_call.1} parent=19 // pred_fallthru
          _
      $region20: #{tpu_custom_call.1} parent=5 // pred_fallthru
        _
      %p195 = scmp.le.s32.totalorder 1, %s16
      %p196 = scmp.lt.s32.totalorder %s16, 3
      %p197 = pnand %p195, %p196
      %p198 = pneg %p197
      // Predicated region
      $region29: #{tpu_custom_call.1} parent=5 // pred_check
        _
      $region30: #{tpu_custom_call.1} parent=5 // pred_check_branch
        %200 = sbr.rel (%p197) target = $region32
      $region31: #{tpu_custom_call.1} parent=5 // pred_region
        %s201 = ssub.s32 %s16, 1
        %s202 = sand.u32 %s52, 1
        %s203 = scalar_lea.sflag [#allocation4], %s202
        %s204 = sand.u32 %s52, 1
        %s205 = smul.addr %s204, 4
        %s206 = scalar_lea.vmem [#allocation3], %s205
        // Predicated region
        $region33: #{tpu_custom_call.1} parent=31 // pred_check
          %p207 = pneg %p65
        $region34: #{tpu_custom_call.1} parent=31 // pred_check_branch
          %209 = sbr.rel (%p207) target = $region36
        $region35: #{tpu_custom_call.1} parent=31 // pred_region
          %210 = dma.done %s203, 64
        $region36: #{tpu_custom_call.1} parent=31 // pred_fallthru
          _
        %s211 = sand.u32 %s52, 1
        %s212 = scalar_lea.sflag [#allocation4], %s211
        %s213 = sand.u32 %s52, 1
        %s214 = smul.addr %s213, 4
        %s215 = scalar_lea.vmem [#allocation3], %s214
        %p216 = pneg %p65
        %p217 = pneg %p62
        %p218 = scmp.lt.s32.totalorder %s26, 1
        %s219 = scalar_select %p218, %s26, 1
        %p220 = scmp.lt.s32.totalorder %s28, 0
        %s221 = scalar_select %p220, %s28, 0
        %s222 = sadd.s32 %s221, %s219
        %s223 = scalar_lea.vmem %s1, %s222
        %p224 = pneg %p93
        %p225 = pneg %p90
        %p226 = pneg %p114
        %p227 = pneg %p111
        %p228 = pneg %p144
        %p229 = pneg %p141
        %s230 = sand.u32 %s131, 1
        %s231 = scalar_lea.sflag [#allocation5], %s230
        %s232 = sand.u32 %s131, 1
        %s233 = smul.addr %s232, 4
        %s234 = scalar_lea.vmem [#allocation6], %s233
        %p235 = scmp.lt.s32.totalorder %s26, 1
        %s236 = scalar_select %p235, %s26, 1
        %p237 = scmp.lt.s32.totalorder %s28, 0
        %s238 = scalar_select %p237, %s28, 0
        %s239 = sadd.s32 %s238, %s236
        %s240 = scalar_lea.vmem %s1, %s239
        %s241 = sld [smem:[#allocation2]]
        %v242 = vld [vmem:[%s206] sm:$0xf]
        %v243 = vld [vmem:[%s240] sm:$0x1]
        %v245 = vlaneseq
        %v246 = vshrl.u32 %v245, 7
        %v247 = vsub.s32 0, %v246
        %v248 = vrot.slane %v243, %v247
        %v250 = vmul.f32 %v242, %v248
        %v251 = vstv %s241
        %v252 = vmul.f32 %v250, %v251
        %vm253 = vcmask 125952
        %254 = vst.msk [vmem:[%s234] sm:$0xf] %vm253, %v252
        %s255 = sand.u32 %s131, 1
        %s256 = scalar_lea.sflag [#allocation5], %s255
        %s257 = sand.u32 %s131, 1
        %s258 = smul.addr %s257, 4
        %s259 = scalar_lea.vmem [#allocation6], %s258
        // Predicated region
        $region37: #{tpu_custom_call.1} parent=31 // pred_check
          %p260 = pneg %p141
        $region38: #{tpu_custom_call.1} parent=31 // pred_check_branch
          %262 = sbr.rel (%p260) target = $region40
        $region39: #{tpu_custom_call.1} parent=31 // pred_region
          %s264 = ssub.s32 64, 64
          %265 = vsyncadd %s256, %s264
          %s266 = sadd.s32 %s28, %s27
          %s267 = sadd.s32 %s266, %s26
          %s268 = smul.addr %s267, 64
          %s269 = scalar_lea.hbm %s3, %s268
          %s271 = sshll.u32 %s259, 4
          %s272 = int_to_ptr.vmem [resolvable:$true] %s271
          %274 = dma.vmem_to_hbm [thread:$0]  %s272, 64, %s269, %s256
        $region40: #{tpu_custom_call.1} parent=31 // pred_fallthru
          _
      $region32: #{tpu_custom_call.1} parent=5 // pred_fallthru
        _
      %p275 = scmp.le.s32.totalorder 2, %s16
      // Predicated region
      $region41: #{tpu_custom_call.1} parent=5 // pred_check
        %p276 = pneg %p275
      $region42: #{tpu_custom_call.1} parent=5 // pred_check_branch
        %278 = sbr.rel (%p276) target = $region44
      $region43: #{tpu_custom_call.1} parent=5 // pred_region
        %s279 = ssub.s32 %s16, 2
        // Predicated region
        $region45: #{tpu_custom_call.1} parent=43 // pred_check
          %p280 = pneg %p147
        $region46: #{tpu_custom_call.1} parent=43 // pred_check_branch
          %282 = sbr.rel (%p280) target = $region48
        $region47: #{tpu_custom_call.1} parent=43 // pred_region
          %s283 = sand.u32 %s132, 1
          %s284 = scalar_lea.sflag [#allocation5], %s283
          %s285 = sand.u32 %s132, 1
          %s286 = smul.addr %s285, 4
          %s287 = scalar_lea.vmem [#allocation6], %s286
          %288 = dma.done %s284, 64
        $region48: #{tpu_custom_call.1} parent=43 // pred_fallthru
          _
      $region44: #{tpu_custom_call.1} parent=5 // pred_fallthru
        _
    $region6: #{tpu_custom_call.1} parent=1 // loop_footer
      %s20 = sadd.s32 1, %s16
    $region7: #{tpu_custom_call.1} parent=1 // loop_footer_branch
      %15 = sbr.rel target = $region3
    $region8: #{tpu_custom_call.1} parent=1 // loop_exit
      _
    %289 = vsyncpa [#allocation4], 1
    %s290 = scalar_lea.sflag [#allocation4], 1
    %291 = vsyncpa %s290, 1
    %292 = vsyncpa [#allocation5], 1
    %s293 = scalar_lea.sflag [#allocation5], 1
    %294 = vsyncpa %s293, 1

</llo_original>
